<compile_context>
chip_gen: v7x
topology: tpu7x:2x2x1
jax: 0.10.0
libtpu: 0.0.40
codegen_flags: <defaults>
</compile_context>

<pallas_src>
import functools

import numpy as np
import jax
import jax.numpy as jnp
from jax.experimental import pallas as pl
from jax.experimental.pallas import tpu as pltpu

NUM_CLASSES = 3                   # small synthetic class count
NUM_ANCHORS = 3                   # YOLOv3: 3 anchors per scale
VEC_DIM = 5 + NUM_CLASSES         # 8 channels per anchor
OUT_ROWS = 7                      # conf, x1, y1, x2, y2, classify, mask
CONST_ROWS = 5                    # w_idx, h_idx, anchor_w, anchor_h, stride


def _decode_kernel(x_ref, c_ref, o_ref, *, thresh, num_classes):
    """x_ref: (VEC_DIM, N*A, L) head logits, channel-major -> every per-channel
    slab is a sublane+lane dense (N*A, L) tile.
    c_ref: (CONST_ROWS, N*A, L) precomputed [w_idx, h_idx, anc_w, anc_h, stride].
    o_ref: (OUT_ROWS, N*A, L) rows [conf, x1, y1, x2, y2, classify, mask]."""
    x = x_ref[...].astype(jnp.float32)          # in-kernel upcast (bf16-safe, no
                                                # wrapper-side f32 HBM round trip)
    w_idx = c_ref[0]
    h_idx = c_ref[1]
    anc_w = c_ref[2]
    anc_h = c_ref[3]
    stride = c_ref[4]

    # _filter: sigmoid on the objectness channel only.
    conf = jax.nn.sigmoid(x[0])
    tx, ty, tw, th = x[1], x[2], x[3], x[4]
    cls = x[5:]                                 # (C, N*A, L) raw class logits

    # argmax over classes (first index on ties) via a static select chain;
    # each step is one dense (N*A, L) VALU op, C is tiny and static.
    best_val = cls[0]
    classify = jnp.zeros_like(best_val)
    for ci in range(1, num_classes):
        better = cls[ci] > best_val             # strict > keeps first max index
        best_val = jnp.where(better, cls[ci], best_val)
        classify = jnp.where(better, jnp.float32(ci), classify)

    # _parse: cx/cy use the *raw* (non-sigmoided) tx/ty, exact torch parity.
    cx = (w_idx + tx) * stride
    cy = (h_idx + ty) * stride
    wb = anc_w * jnp.exp(tw)                    # no clamp, parity with torch
    hb = anc_h * jnp.exp(th)
    x1 = cx - wb * 0.5
    y1 = cy - hb * 0.5
    x2 = x1 + wb
    y2 = y1 + hb
    mask = (conf > jnp.float32(thresh)).astype(jnp.float32)

    # 7 packed row stores, each a full sublane+lane dense (N*A, L) slab
    # (equivalent vst count to a single stacked store; no masked vst.msk rows).
    o_ref[0] = conf
    o_ref[1] = x1
    o_ref[2] = y1
    o_ref[3] = x2
    o_ref[4] = y2
    o_ref[5] = classify
    o_ref[6] = mask


def _build_const(scale_meta, anchors_by_key, N, A):
    """Per-lane decode constants, concatenated over the three scales.
    Returns float32 numpy array (CONST_ROWS, N*A, L)."""
    cols = []
    for key, H, W, stride in scale_meta:
        HW = H * W
        hw = np.arange(HW, dtype=np.int64)
        anc = np.asarray(anchors_by_key[key], np.float32)   # (A, 2)
        rows = np.empty((CONST_ROWS, A, HW), np.float32)
        rows[0] = (hw % W).astype(np.float32)[None, :]       # w grid index
        rows[1] = (hw // W).astype(np.float32)[None, :]      # h grid index
        rows[2] = anc[:, 0:1]                                # anchor w
        rows[3] = anc[:, 1:2]                                # anchor h
        rows[4] = np.float32(stride)
        cols.append(rows)
    const = np.concatenate(cols, axis=-1)                    # (5, A, L)
    const = np.ascontiguousarray(
        np.broadcast_to(const[:, None], (CONST_ROWS, N, A, const.shape[-1])))
    return const.reshape(CONST_ROWS, N * A, -1)


@functools.partial(jax.jit, static_argnames=("thresh", "anchors_static"))
def _decode_all(out_13, out_26, out_52, *, thresh, anchors_static):
    """Single fused decode of all three YOLO heads -> dense (7, N*A, L) slab."""
    anchors_by_key = {k: v for k, v in anchors_static}
    heads = ((out_13, 32, 13), (out_26, 16, 26), (out_52, 8, 52))
    A, V = NUM_ANCHORS, VEC_DIM
    N = out_13.shape[0]

    xs, meta = [], []
    for raw, stride, key in heads:
        n, c, h, w = raw.shape
        xs.append(raw.reshape(n, A, V, h * w))       # free NCHW-contiguous view
        meta.append((key, h, w, stride))
    x = jnp.concatenate(xs, axis=-1)                 # (N, A, V, L)
    L = x.shape[-1]
    # Channel-major (V, N*A, L): one small XLA fusion that buys sublane-dense
    # math for every per-channel op inside the kernel.
    xt = jnp.transpose(x, (2, 0, 1, 3)).reshape(V, N * A, L)

    # Trace-time numpy -> embedded constant, no runtime recompute / transfer.
    const = jnp.asarray(_build_const(meta, anchors_by_key, N, A))

    kernel = functools.partial(_decode_kernel, thresh=float(thresh),
                               num_classes=NUM_CLASSES)
    return pl.pallas_call(
        kernel,
        out_shape=jax.ShapeDtypeStruct((OUT_ROWS, N * A, L), jnp.float32),
        in_specs=[pl.BlockSpec(memory_space=pltpu.MemorySpace.VMEM),
                  pl.BlockSpec(memory_space=pltpu.MemorySpace.VMEM)],
        out_specs=pl.BlockSpec(memory_space=pltpu.MemorySpace.VMEM),
    )(xt, const)


def detector_forward(out_13, out_26, out_52, thresh, anchors):
    """Equivalent of Detector.forward given the three network head outputs."""
    anchors_static = tuple(
        (k, tuple(tuple(float(c) for c in row) for row in anchors[k]))
        for k in (13, 26, 52))

    dense = _decode_all(out_13, out_26, out_52,
                        thresh=float(thresh), anchors_static=anchors_static)
    # Single host sync + single (7-row, no padding) D2H transfer.
    dense = np.asarray(jax.block_until_ready(dense))          # (7, N*A, L)

    N = out_13.shape[0]
    A = NUM_ANCHORS
    parts, off = [], 0
    for raw in (out_13, out_26, out_52):                      # torch concat order
        H, W = int(raw.shape[2]), int(raw.shape[3])
        HW = H * W
        blk = dense[:, :, off:off + HW]                       # (7, N*A, HW)
        off += HW
        blk = blk.reshape(OUT_ROWS, N, A, H, W)
        # torch mask.nonzero() / boolean-index order: row-major over (n, h, w, a)
        blk = np.transpose(blk, (1, 3, 4, 2, 0)).reshape(N * H * W * A, OUT_ROWS)
        m = blk[:, 6] > 0.5
        parts.append(blk[m, :6])                              # host-side compaction
    if parts:
        return np.concatenate(parts, axis=0).astype(np.float32)
    return np.zeros((0, 6), np.float32)


def _reference_numpy(out_13, out_26, out_52, thresh, anchors):
    """Pure-numpy port of Detector._filter/_parse for verification."""
    def sigmoid(v):
        return 1.0 / (1.0 + np.exp(-v))

    parts = []
    for raw, t, key in ((out_13, 32, 13), (out_26, 16, 26), (out_52, 8, 52)):
        raw = np.asarray(raw, np.float32)
        N, _, H, W = raw.shape
        o = np.transpose(raw, (0, 2, 3, 1)).reshape(N, H, W, NUM_ANCHORS, VEC_DIM).copy()
        o[..., 0] = sigmoid(o[..., 0])
        mask = o[..., 0] > thresh
        idxs = np.argwhere(mask)
        vecs = o[mask]
        anc = np.asarray(anchors[key], np.float32)
        if len(vecs) == 0:
            parts.append(np.zeros((0, 6), np.float32))
            continue
        a = idxs[:, 3]
        conf = vecs[:, 0]
        classify = np.argmax(vecs[:, 5:], axis=1).astype(np.float32)
        cy = (idxs[:, 1].astype(np.float32) + vecs[:, 2]) * t
        cx = (idxs[:, 2].astype(np.float32) + vecs[:, 1]) * t
        w = anc[a, 0] * np.exp(vecs[:, 3])
        h = anc[a, 1] * np.exp(vecs[:, 4])
        x1 = cx - w / 2
        y1 = cy - h / 2
        x2 = x1 + w
        y2 = y1 + h
        parts.append(np.stack([conf, x1, y1, x2, y2, classify], axis=1))
    return np.concatenate(parts, axis=0)


if __name__ == "__main__":
    key = jax.random.PRNGKey(0)
    k13, k26, k52 = jax.random.split(key, 3)

    # Small synthetic "network head" outputs (strides 32/16/8 on a 128px image).
    N = 2
    C = NUM_ANCHORS * VEC_DIM  # 24
    out_13 = jax.random.normal(k13, (N, C, 4, 4), dtype=jnp.float32)
    out_26 = jax.random.normal(k26, (N, C, 8, 8), dtype=jnp.float32)
    out_52 = jax.random.normal(k52, (N, C, 16, 16), dtype=jnp.float32)

    anchors = {
        13: [[116.0, 90.0], [156.0, 198.0], [373.0, 326.0]],
        26: [[30.0, 61.0], [62.0, 45.0], [59.0, 119.0]],
        52: [[10.0, 13.0], [16.0, 30.0], [33.0, 23.0]],
    }
    thresh = 0.6

    result = detector_forward(out_13, out_26, out_52, thresh, anchors)
    ref = _reference_numpy(np.asarray(out_13), np.asarray(out_26),
                           np.asarray(out_52), thresh, anchors)

    assert result.shape == ref.shape, (result.shape, ref.shape)
    np.testing.assert_allclose(result, ref, rtol=1e-4, atol=1e-3)
    print("KERNEL_OK")
</pallas_src>

<mosaic_0001>
module attributes {stable_mosaic.version = 11 : i64} {
  func.func @_decode_kernel(%arg0: memref<8x6x336xf32, #tpu.memory_space<vmem>>, %arg1: memref<5x6x336xf32, #tpu.memory_space<vmem>>, %arg2: memref<7x6x336xf32, #tpu.memory_space<vmem>>) attributes {dimension_semantics = [], scalar_prefetch = 0 : i64, scratch_operands = 0 : i64, tpu.core_type = #tpu.core_type<tc>} {
    %c0 = arith.constant 0 : index
    %c0_0 = arith.constant 0 : index
    %c0_1 = arith.constant 0 : index
    %0 = vector.load %arg0[%c0, %c0_0, %c0_1] : memref<8x6x336xf32, #tpu.memory_space<vmem>>, vector<8x6x336xf32>
    %c0_2 = arith.constant 0 : index
    %c0_3 = arith.constant 0 : index
    %c0_4 = arith.constant 0 : index
    %1 = vector.load %arg1[%c0_2, %c0_3, %c0_4] : memref<5x6x336xf32, #tpu.memory_space<vmem>>, vector<1x6x336xf32>
    %2 = vector.shape_cast %1 : vector<1x6x336xf32> to vector<6x336xf32>
    %c1 = arith.constant 1 : index
    %c0_5 = arith.constant 0 : index
    %c0_6 = arith.constant 0 : index
    %3 = vector.load %arg1[%c1, %c0_5, %c0_6] : memref<5x6x336xf32, #tpu.memory_space<vmem>>, vector<1x6x336xf32>
    %4 = vector.shape_cast %3 : vector<1x6x336xf32> to vector<6x336xf32>
    %c2 = arith.constant 2 : index
    %c0_7 = arith.constant 0 : index
    %c0_8 = arith.constant 0 : index
    %5 = vector.load %arg1[%c2, %c0_7, %c0_8] : memref<5x6x336xf32, #tpu.memory_space<vmem>>, vector<1x6x336xf32>
    %6 = vector.shape_cast %5 : vector<1x6x336xf32> to vector<6x336xf32>
    %c3 = arith.constant 3 : index
    %c0_9 = arith.constant 0 : index
    %c0_10 = arith.constant 0 : index
    %7 = vector.load %arg1[%c3, %c0_9, %c0_10] : memref<5x6x336xf32, #tpu.memory_space<vmem>>, vector<1x6x336xf32>
    %8 = vector.shape_cast %7 : vector<1x6x336xf32> to vector<6x336xf32>
    %c4 = arith.constant 4 : index
    %c0_11 = arith.constant 0 : index
    %c0_12 = arith.constant 0 : index
    %9 = vector.load %arg1[%c4, %c0_11, %c0_12] : memref<5x6x336xf32, #tpu.memory_space<vmem>>, vector<1x6x336xf32>
    %10 = vector.shape_cast %9 : vector<1x6x336xf32> to vector<6x336xf32>
    %11 = vector.extract_strided_slice %0 {offsets = [0, 0, 0], sizes = [1, 6, 336], strides = [1, 1, 1]} : vector<8x6x336xf32> to vector<1x6x336xf32>
    %12 = vector.shape_cast %11 : vector<1x6x336xf32> to vector<6x336xf32>
    %13 = arith.negf %12 : vector<6x336xf32>
    %14 = math.exp %13 : vector<6x336xf32>
    %cst = arith.constant 1.000000e+00 : f32
    %15 = vector.broadcast %cst : f32 to vector<6x336xf32>
    %16 = arith.addf %15, %14 : vector<6x336xf32>
    %17 = arith.divf %15, %16 : vector<6x336xf32>
    %18 = vector.extract_strided_slice %0 {offsets = [1, 0, 0], sizes = [1, 6, 336], strides = [1, 1, 1]} : vector<8x6x336xf32> to vector<1x6x336xf32>
    %19 = vector.shape_cast %18 : vector<1x6x336xf32> to vector<6x336xf32>
    %20 = vector.extract_strided_slice %0 {offsets = [2, 0, 0], sizes = [1, 6, 336], strides = [1, 1, 1]} : vector<8x6x336xf32> to vector<1x6x336xf32>
    %21 = vector.shape_cast %20 : vector<1x6x336xf32> to vector<6x336xf32>
    %22 = vector.extract_strided_slice %0 {offsets = [3, 0, 0], sizes = [1, 6, 336], strides = [1, 1, 1]} : vector<8x6x336xf32> to vector<1x6x336xf32>
    %23 = vector.shape_cast %22 : vector<1x6x336xf32> to vector<6x336xf32>
    %24 = vector.extract_strided_slice %0 {offsets = [4, 0, 0], sizes = [1, 6, 336], strides = [1, 1, 1]} : vector<8x6x336xf32> to vector<1x6x336xf32>
    %25 = vector.shape_cast %24 : vector<1x6x336xf32> to vector<6x336xf32>
    %26 = vector.extract_strided_slice %0 {offsets = [5, 0, 0], sizes = [3, 6, 336], strides = [1, 1, 1]} : vector<8x6x336xf32> to vector<3x6x336xf32>
    %27 = vector.extract_strided_slice %26 {offsets = [0, 0, 0], sizes = [1, 6, 336], strides = [1, 1, 1]} : vector<3x6x336xf32> to vector<1x6x336xf32>
    %28 = vector.shape_cast %27 : vector<1x6x336xf32> to vector<6x336xf32>
    %cst_13 = arith.constant 0.000000e+00 : f32
    %29 = vector.broadcast %cst_13 : f32 to vector<6x336xf32>
    %30 = vector.extract_strided_slice %26 {offsets = [1, 0, 0], sizes = [1, 6, 336], strides = [1, 1, 1]} : vector<3x6x336xf32> to vector<1x6x336xf32>
    %31 = vector.shape_cast %30 : vector<1x6x336xf32> to vector<6x336xf32>
    %32 = arith.cmpf ogt, %31, %28 : vector<6x336xf32>
    %33 = vector.extract_strided_slice %26 {offsets = [1, 0, 0], sizes = [1, 6, 336], strides = [1, 1, 1]} : vector<3x6x336xf32> to vector<1x6x336xf32>
    %34 = vector.shape_cast %33 : vector<1x6x336xf32> to vector<6x336xf32>
    %35 = arith.select %32, %34, %28 : vector<6x336xi1>, vector<6x336xf32>
    %cst_14 = arith.constant 1.000000e+00 : f32
    %36 = vector.broadcast %cst_14 : f32 to vector<6x336xf32>
    %37 = arith.select %32, %36, %29 : vector<6x336xi1>, vector<6x336xf32>
    %38 = vector.extract_strided_slice %26 {offsets = [2, 0, 0], sizes = [1, 6, 336], strides = [1, 1, 1]} : vector<3x6x336xf32> to vector<1x6x336xf32>
    %39 = vector.shape_cast %38 : vector<1x6x336xf32> to vector<6x336xf32>
    %40 = arith.cmpf ogt, %39, %35 : vector<6x336xf32>
    %cst_15 = arith.constant 2.000000e+00 : f32
    %41 = vector.broadcast %cst_15 : f32 to vector<6x336xf32>
    %42 = arith.select %40, %41, %37 : vector<6x336xi1>, vector<6x336xf32>
    %43 = arith.addf %2, %19 : vector<6x336xf32>
    %44 = arith.mulf %43, %10 : vector<6x336xf32>
    %45 = arith.addf %4, %21 : vector<6x336xf32>
    %46 = arith.mulf %45, %10 : vector<6x336xf32>
    %47 = math.exp %23 : vector<6x336xf32>
    %48 = arith.mulf %6, %47 : vector<6x336xf32>
    %49 = math.exp %25 : vector<6x336xf32>
    %50 = arith.mulf %8, %49 : vector<6x336xf32>
    %cst_16 = arith.constant 5.000000e-01 : f32
    %51 = vector.broadcast %cst_16 : f32 to vector<6x336xf32>
    %52 = arith.mulf %48, %51 : vector<6x336xf32>
    %53 = arith.subf %44, %52 : vector<6x336xf32>
    %cst_17 = arith.constant 5.000000e-01 : f32
    %54 = vector.broadcast %cst_17 : f32 to vector<6x336xf32>
    %55 = arith.mulf %50, %54 : vector<6x336xf32>
    %56 = arith.subf %46, %55 : vector<6x336xf32>
    %57 = arith.addf %53, %48 : vector<6x336xf32>
    %58 = arith.addf %56, %50 : vector<6x336xf32>
    %cst_18 = arith.constant 6.000000e-01 : f32
    %59 = vector.broadcast %cst_18 : f32 to vector<6x336xf32>
    %60 = arith.cmpf ogt, %17, %59 : vector<6x336xf32>
    %61 = arith.extui %60 : vector<6x336xi1> to vector<6x336xi32>
    %62 = arith.sitofp %61 : vector<6x336xi32> to vector<6x336xf32>
    %c0_19 = arith.constant 0 : index
    %c0_20 = arith.constant 0 : index
    %c0_21 = arith.constant 0 : index
    %63 = vector.load %arg2[%c0_19, %c0_20, %c0_21] : memref<7x6x336xf32, #tpu.memory_space<vmem>>, vector<1x6x336xf32>
    %64 = vector.shape_cast %63 : vector<1x6x336xf32> to vector<6x336xf32>
    %65 = vector.shape_cast %17 : vector<6x336xf32> to vector<1x6x336xf32>
    tpu.vector_store %arg2[%c0_19, %c0_20, %c0_21], %65 {strides = array<i32>} : memref<7x6x336xf32, #tpu.memory_space<vmem>>, vector<1x6x336xf32>,
    %c1_22 = arith.constant 1 : index
    %c0_23 = arith.constant 0 : index
    %c0_24 = arith.constant 0 : index
    %66 = vector.load %arg2[%c1_22, %c0_23, %c0_24] : memref<7x6x336xf32, #tpu.memory_space<vmem>>, vector<1x6x336xf32>
    %67 = vector.shape_cast %66 : vector<1x6x336xf32> to vector<6x336xf32>
    %68 = vector.shape_cast %53 : vector<6x336xf32> to vector<1x6x336xf32>
    tpu.vector_store %arg2[%c1_22, %c0_23, %c0_24], %68 {strides = array<i32>} : memref<7x6x336xf32, #tpu.memory_space<vmem>>, vector<1x6x336xf32>,
    %c2_25 = arith.constant 2 : index
    %c0_26 = arith.constant 0 : index
    %c0_27 = arith.constant 0 : index
    %69 = vector.load %arg2[%c2_25, %c0_26, %c0_27] : memref<7x6x336xf32, #tpu.memory_space<vmem>>, vector<1x6x336xf32>
    %70 = vector.shape_cast %69 : vector<1x6x336xf32> to vector<6x336xf32>
    %71 = vector.shape_cast %56 : vector<6x336xf32> to vector<1x6x336xf32>
    tpu.vector_store %arg2[%c2_25, %c0_26, %c0_27], %71 {strides = array<i32>} : memref<7x6x336xf32, #tpu.memory_space<vmem>>, vector<1x6x336xf32>,
    %c3_28 = arith.constant 3 : index
    %c0_29 = arith.constant 0 : index
    %c0_30 = arith.constant 0 : index
    %72 = vector.load %arg2[%c3_28, %c0_29, %c0_30] : memref<7x6x336xf32, #tpu.memory_space<vmem>>, vector<1x6x336xf32>
    %73 = vector.shape_cast %72 : vector<1x6x336xf32> to vector<6x336xf32>
    %74 = vector.shape_cast %57 : vector<6x336xf32> to vector<1x6x336xf32>
    tpu.vector_store %arg2[%c3_28, %c0_29, %c0_30], %74 {strides = array<i32>} : memref<7x6x336xf32, #tpu.memory_space<vmem>>, vector<1x6x336xf32>,
    %c4_31 = arith.constant 4 : index
    %c0_32 = arith.constant 0 : index
    %c0_33 = arith.constant 0 : index
    %75 = vector.load %arg2[%c4_31, %c0_32, %c0_33] : memref<7x6x336xf32, #tpu.memory_space<vmem>>, vector<1x6x336xf32>
    %76 = vector.shape_cast %75 : vector<1x6x336xf32> to vector<6x336xf32>
    %77 = vector.shape_cast %58 : vector<6x336xf32> to vector<1x6x336xf32>
    tpu.vector_store %arg2[%c4_31, %c0_32, %c0_33], %77 {strides = array<i32>} : memref<7x6x336xf32, #tpu.memory_space<vmem>>, vector<1x6x336xf32>,
    %c5 = arith.constant 5 : index
    %c0_34 = arith.constant 0 : index
    %c0_35 = arith.constant 0 : index
    %78 = vector.load %arg2[%c5, %c0_34, %c0_35] : memref<7x6x336xf32, #tpu.memory_space<vmem>>, vector<1x6x336xf32>
    %79 = vector.shape_cast %78 : vector<1x6x336xf32> to vector<6x336xf32>
    %80 = vector.shape_cast %42 : vector<6x336xf32> to vector<1x6x336xf32>
    tpu.vector_store %arg2[%c5, %c0_34, %c0_35], %80 {strides = array<i32>} : memref<7x6x336xf32, #tpu.memory_space<vmem>>, vector<1x6x336xf32>,
    %c6 = arith.constant 6 : index
    %c0_36 = arith.constant 0 : index
    %c0_37 = arith.constant 0 : index
    %81 = vector.load %arg2[%c6, %c0_36, %c0_37] : memref<7x6x336xf32, #tpu.memory_space<vmem>>, vector<1x6x336xf32>
    %82 = vector.shape_cast %81 : vector<1x6x336xf32> to vector<6x336xf32>
    %83 = vector.shape_cast %62 : vector<6x336xf32> to vector<1x6x336xf32>
    tpu.vector_store %arg2[%c6, %c0_36, %c0_37], %83 {strides = array<i32>} : memref<7x6x336xf32, #tpu.memory_space<vmem>>, vector<1x6x336xf32>,
    return
  }
}

</mosaic_0001>

<llo_original>
// kernel: _decode_all.1
$region0: #{_decode_all.1}
  #allocation0 [shape = 'u32[]', space=smem, size = 0x4, offset = 0x4, fixed_abs, tag = 'smem constant byte address 0x4 - core index']
  #allocation1 [shape = 'u32[144,128]{1,0:T(1,128)}', space=vmem, size = 0x12000, scoped, tag = 'internal scratch']
  %s0 = inlined_call_operand.vmem [shape: f32[8,6,336], index: 0, kind: input, shape index: {}]
  %s1 = inlined_call_operand.vmem [shape: f32[5,6,336], index: 1, kind: input, shape index: {}]
  %s2 = inlined_call_operand.vmem [shape: f32[7,6,336], index: 2, kind: output, shape index: {}]
  %s3 = sld [smem:[#allocation0]]
  $region18: #{_decode_all.1} parent=0
    _
  %s5 = ssub.s32 1, %s3
  %s6 = scalar_select 0, %s5, %s3
  // Predicated region
  $region2: #{_decode_all.1} parent=0 // pred_check
    _
  $region3: #{_decode_all.1} parent=0 // pred_check_branch
    %8 = sbr.rel (0) target = $region5
  $region4: #{_decode_all.1} parent=0 // pred_region
    _
  $region5: #{_decode_all.1} parent=0 // pred_fallthru
    _
  // Predicated region
  $region6: #{_decode_all.1} parent=0 // pred_check
    _
  $region7: #{_decode_all.1} parent=0 // pred_check_branch
    %10 = sbr.rel (0) target = $region9
  $region8: #{_decode_all.1} parent=0 // pred_region
    _
  $region9: #{_decode_all.1} parent=0 // pred_fallthru
    _
  %v11 = vld [vmem:[%s0] sm:$0x3f]
  %v12 = vld [vmem:[%s0 + $0x8] sm:$0x3f]
  %v13 = vld [vmem:[%s0 + $0x10] sm:$0x3f]
  %v14 = vld [vmem:[%s0 + $0x18] sm:$0x3f]
  %v15 = vld [vmem:[%s0 + $0x20] sm:$0x3f]
  %v16 = vld [vmem:[%s0 + $0x28] sm:$0x3f]
  %v17 = vld [vmem:[%s0 + $0x30] sm:$0x3f]
  %v18 = vld [vmem:[%s0 + $0x38] sm:$0x3f]
  %v19 = vld [vmem:[%s0 + $0x40] sm:$0x3f]
  %v20 = vld [vmem:[%s0 + $0x48] sm:$0x3f]
  %v21 = vld [vmem:[%s0 + $0x50] sm:$0x3f]
  %v22 = vld [vmem:[%s0 + $0x58] sm:$0x3f]
  %v23 = vld [vmem:[%s0 + $0x60] sm:$0x3f]
  %v24 = vld [vmem:[%s0 + $0x68] sm:$0x3f]
  %v25 = vld [vmem:[%s0 + $0x70] sm:$0x3f]
  %v26 = vld [vmem:[%s0 + $0x78] sm:$0x3f]
  %v27 = vld [vmem:[%s0 + $0x80] sm:$0x3f]
  %v28 = vld [vmem:[%s0 + $0x88] sm:$0x3f]
  %v29 = vld [vmem:[%s0 + $0x90] sm:$0x3f]
  %v30 = vld [vmem:[%s0 + $0x98] sm:$0x3f]
  %v31 = vld [vmem:[%s0 + $0xa0] sm:$0x3f]
  %v32 = vld [vmem:[%s0 + $0xa8] sm:$0x3f]
  %v33 = vld [vmem:[%s0 + $0xb0] sm:$0x3f]
  %v34 = vld [vmem:[%s0 + $0xb8] sm:$0x3f]
  %v35 = vld [vmem:[%s1] sm:$0x3f]
  %v36 = vld [vmem:[%s1 + $0x8] sm:$0x3f]
  %v37 = vld [vmem:[%s1 + $0x10] sm:$0x3f]
  %s38 = scalar_lea.vmem %s1, 24
  %v39 = vld [vmem:[%s38] sm:$0x3f]
  %v40 = vld [vmem:[%s38 + $0x8] sm:$0x3f]
  %v41 = vld [vmem:[%s38 + $0x10] sm:$0x3f]
  %s42 = scalar_lea.vmem %s1, 48
  %v43 = vld [vmem:[%s42] sm:$0x3f]
  %v44 = vld [vmem:[%s42 + $0x8] sm:$0x3f]
  %v45 = vld [vmem:[%s42 + $0x10] sm:$0x3f]
  %s46 = scalar_lea.vmem %s1, 72
  %v47 = vld [vmem:[%s46] sm:$0x3f]
  %v48 = vld [vmem:[%s46 + $0x8] sm:$0x3f]
  %v49 = vld [vmem:[%s46 + $0x10] sm:$0x3f]
  %s50 = scalar_lea.vmem %s1, 96
  %v51 = vld [vmem:[%s50] sm:$0x3f]
  %v52 = vld [vmem:[%s50 + $0x8] sm:$0x3f]
  %v53 = vld [vmem:[%s50 + $0x10] sm:$0x3f]
  %v54 = vxor.u32 %v11, 2147483648
  %v55 = vxor.u32 %v12, 2147483648
  %v56 = vxor.u32 %v13, 2147483648
  %v57 = vmul.f32 %v54, 1.442695
  %v58 = vpow.pop %v57
  %v59 = vmul.f32 %v55, 1.442695
  %v60 = vpow.pop %v59
  %v61 = vmul.f32 %v56, 1.442695
  %v62 = vpow.pop %v61
  %v63 = vadd.f32 %v58, 1.0
  %v64 = vadd.f32 %v60, 1.0
  %v65 = vadd.f32 %v62, 1.0
  %v66 = vrcp.pop %v63
  %v67 = vmul.f32 1.0, %v66
  %v68 = vrcp.pop %v64
  %v69 = vmul.f32 1.0, %v68
  %v70 = vrcp.pop %v65
  %v71 = vmul.f32 1.0, %v70
  %vm72 = vcmp.gt.f32.partialorder %v29, %v26
  %vm73 = vcmp.gt.f32.partialorder %v30, %v27
  %vm74 = vcmp.gt.f32.partialorder %v31, %v28
  %v75 = vsel %vm72, %v29, %v26
  %v76 = vsel %vm73, %v30, %v27
  %v77 = vsel %vm74, %v31, %v28
  %v78 = vsel %vm72, 1.0, 0.0
  %v79 = vsel %vm73, 1.0, 0.0
  %v80 = vsel %vm74, 1.0, 0.0
  %vm81 = vcmp.gt.f32.partialorder %v32, %v75
  %vm82 = vcmp.gt.f32.partialorder %v33, %v76
  %vm83 = vcmp.gt.f32.partialorder %v34, %v77
  %v84 = vsel %vm81, 2.0, %v78
  %v85 = vsel %vm82, 2.0, %v79
  %v86 = vsel %vm83, 2.0, %v80
  %v87 = vadd.f32 %v35, %v14
  %v88 = vadd.f32 %v36, %v15
  %v89 = vadd.f32 %v37, %v16
  %v90 = vmul.f32 %v87, %v51
  %v91 = vmul.f32 %v88, %v52
  %v92 = vmul.f32 %v89, %v53
  %v93 = vadd.f32 %v39, %v17
  %v94 = vadd.f32 %v40, %v18
  %v95 = vadd.f32 %v41, %v19
  %v96 = vmul.f32 %v93, %v51
  %v97 = vmul.f32 %v94, %v52
  %v98 = vmul.f32 %v95, %v53
  %v99 = vmul.f32 %v20, 1.442695
  %v100 = vpow.pop %v99
  %v101 = vmul.f32 %v21, 1.442695
  %v102 = vpow.pop %v101
  %v103 = vmul.f32 %v22, 1.442695
  %v104 = vpow.pop %v103
  %v105 = vmul.f32 %v43, %v100
  %v106 = vmul.f32 %v44, %v102
  %v107 = vmul.f32 %v45, %v104
  %v108 = vmul.f32 %v23, 1.442695
  %v109 = vpow.pop %v108
  %v110 = vmul.f32 %v24, 1.442695
  %v111 = vpow.pop %v110
  %v112 = vmul.f32 %v25, 1.442695
  %v113 = vpow.pop %v112
  %v114 = vmul.f32 %v47, %v109
  %v115 = vmul.f32 %v48, %v111
  %v116 = vmul.f32 %v49, %v113
  %v117 = vmul.f32 %v105, 0.5
  %v118 = vmul.f32 %v106, 0.5
  %v119 = vmul.f32 %v107, 0.5
  %v120 = vsub.f32 %v90, %v117
  %v121 = vsub.f32 %v91, %v118
  %v122 = vsub.f32 %v92, %v119
  %v123 = vmul.f32 %v114, 0.5
  %v124 = vmul.f32 %v115, 0.5
  %v125 = vmul.f32 %v116, 0.5
  %v126 = vsub.f32 %v96, %v123
  %v127 = vsub.f32 %v97, %v124
  %v128 = vsub.f32 %v98, %v125
  %v129 = vadd.f32 %v120, %v105
  %v130 = vadd.f32 %v121, %v106
  %v131 = vadd.f32 %v122, %v107
  %v132 = vadd.f32 %v126, %v114
  %v133 = vadd.f32 %v127, %v115
  %v134 = vadd.f32 %v128, %v116
  %vm135 = vcmp.gt.f32.partialorder %v67, 0.6
  %vm136 = vcmp.gt.f32.partialorder %v69, 0.6
  %vm137 = vcmp.gt.f32.partialorder %v71, 0.6
  %v138 = vsel %vm135, 1, 0
  %v139 = vsel %vm136, 1, 0
  %v140 = vsel %vm137, 1, 0
  %v141 = vcvt.s32.f32 %v138
  %v142 = vcvt.s32.f32 %v139
  %v143 = vcvt.s32.f32 %v140
  %144 = vst [vmem:[%s2] sm:$0x3f] %v67
  %145 = vst [vmem:[%s2 + $0x8] sm:$0x3f] %v69
  %vm146 = vcmask 652288
  %147 = vst.msk [vmem:[%s2 + $0x10] sm:$0x3f] %vm146, %v71
  %s148 = scalar_lea.vmem %s2, 24
  %149 = vst [vmem:[%s148] sm:$0x3f] %v120
  %150 = vst [vmem:[%s148 + $0x8] sm:$0x3f] %v121
  %151 = vst.msk [vmem:[%s148 + $0x10] sm:$0x3f] %vm146, %v122
  %s152 = scalar_lea.vmem %s2, 48
  %153 = vst [vmem:[%s152] sm:$0x3f] %v126
  %154 = vst [vmem:[%s152 + $0x8] sm:$0x3f] %v127
  %155 = vst.msk [vmem:[%s152 + $0x10] sm:$0x3f] %vm146, %v128
  %s156 = scalar_lea.vmem %s2, 72
  %157 = vst [vmem:[%s156] sm:$0x3f] %v129
  %158 = vst [vmem:[%s156 + $0x8] sm:$0x3f] %v130
  %159 = vst.msk [vmem:[%s156 + $0x10] sm:$0x3f] %vm146, %v131
  %s160 = scalar_lea.vmem %s2, 96
  %161 = vst [vmem:[%s160] sm:$0x3f] %v132
  %162 = vst [vmem:[%s160 + $0x8] sm:$0x3f] %v133
  %163 = vst.msk [vmem:[%s160 + $0x10] sm:$0x3f] %vm146, %v134
  %s164 = scalar_lea.vmem %s2, 120
  %165 = vst [vmem:[%s164] sm:$0x3f] %v84
  %166 = vst [vmem:[%s164 + $0x8] sm:$0x3f] %v85
  %167 = vst.msk [vmem:[%s164 + $0x10] sm:$0x3f] %vm146, %v86
  %s168 = scalar_lea.vmem %s2, 144
  %169 = vst [vmem:[%s168] sm:$0x3f] %v141
  %170 = vst [vmem:[%s168 + $0x8] sm:$0x3f] %v142
  %171 = vst.msk [vmem:[%s168 + $0x10] sm:$0x3f] %vm146, %v143
  // Predicated region
  $region10: #{_decode_all.1} parent=0 // pred_check
    _
  $region11: #{_decode_all.1} parent=0 // pred_check_branch
    %173 = sbr.rel (0) target = $region13
  $region12: #{_decode_all.1} parent=0 // pred_region
    _
  $region13: #{_decode_all.1} parent=0 // pred_fallthru
    _
  // Predicated region
  $region14: #{_decode_all.1} parent=0 // pred_check
    _
  $region15: #{_decode_all.1} parent=0 // pred_check_branch
    %175 = sbr.rel (0) target = $region17
  $region16: #{_decode_all.1} parent=0 // pred_region
    _
  $region17: #{_decode_all.1} parent=0 // pred_fallthru
    _

</llo_original>
